<compile_context>
chip_gen: v7x
topology: tpu7x:2x2x1
jax: 0.10.0
libtpu: 0.0.40
codegen_flags: <defaults>
</compile_context>

<pallas_src>
import jax
import jax.numpy as jnp
from jax.experimental import pallas as pl
from jax.experimental.pallas import tpu as pltpu


def _listnet_loss_kernel(y_pred_ref, y_true_ref, out_ref):
    # Tile shapes: inputs (N, TILE_M), output (1, TILE_M). The softmax axis
    # (N, torch dim=0) is kept whole inside every tile.
    yp = y_pred_ref[...].astype(jnp.float32)
    yt = y_true_ref[...].astype(jnp.float32)

    # log-softmax(y_pred, axis=0):  log_pred = p_shift - log(Z_p)
    p_shift = yp - jnp.max(yp, axis=0, keepdims=True)            # (N, T)
    z_p = jnp.sum(jnp.exp(p_shift), axis=0, keepdims=True)       # (1, T)

    # softmax(-y_true, axis=0): exponent = min(y_true) - y_true
    t_exp = jnp.exp(jnp.min(yt, axis=0, keepdims=True) - yt)     # (N, T)
    z_t = jnp.sum(t_exp, axis=0, keepdims=True)                  # (1, T)

    # -sum_i true_max[i] * log_pred[i] per column, using sum_i true_max == 1:
    #   = log(Z_p) - (sum_i t_exp * p_shift) / Z_t
    weighted = jnp.sum(t_exp * p_shift, axis=0, keepdims=True)   # (1, T)
    out_ref[...] = jnp.log(z_p) - weighted / z_t


def _choose_tiling(n, m, itemsize, max_tile_bytes):
    """Pick (tile_m, num_tiles, m_pad).

    tile_m is a multiple of 128; m is padded up to num_tiles * tile_m.
    Constraints (per perf review):
      * per-input DMA tile <= max_tile_bytes (in the *input* dtype),
      * >= 4 grid steps when M allows (pipelining), >= 2 when possible,
      * prefer an even number of tiles (v7x has 2 TensorCores).
    """
    cdiv = lambda a, b: -(-a // b)
    units = max(1, cdiv(m, 128))                       # 128-lane column groups
    # Byte cap on the DMA'd tile (dtype-aware).
    cap_units = max(1, max_tile_bytes // (n * itemsize * 128))
    # Grid granularity: aim for >= 4 tiles (>= 2 if M is small).
    min_tiles = 4 if units >= 4 else (2 if units >= 2 else 1)
    gran_units = max(1, units // min_tiles)
    tile_units = max(1, min(cap_units, gran_units))
    num_tiles = cdiv(units, tile_units)
    # Prefer an even tile count so both v7x TensorCores get work.
    if num_tiles > 1 and num_tiles % 2 == 1:
        tu2 = max(1, cdiv(units, num_tiles + 1))
        if cdiv(units, tu2) % 2 == 0:
            tile_units = tu2
            num_tiles = cdiv(units, tu2)
    tile_m = tile_units * 128
    m_pad = num_tiles * tile_m
    return tile_m, num_tiles, m_pad


def listnet_loss(y_pred, y_true, max_tile_bytes=1 << 20):
    """ListNet loss. y_pred, y_true: (N, M), softmax over axis 0 (torch dim=0).
    Returns scalar float32."""
    assert y_pred.shape == y_true.shape and y_pred.ndim == 2
    n, m = y_pred.shape
    itemsize = jnp.dtype(y_pred.dtype).itemsize
    tile_m, num_tiles, m_pad = _choose_tiling(n, m, itemsize, max_tile_bytes)

    if m_pad != m:
        # Zero-pad the lane axis; padded columns each produce log(N) and are
        # sliced out before the final sum.
        pad = ((0, 0), (0, m_pad - m))
        y_pred = jnp.pad(y_pred, pad)
        y_true = jnp.pad(y_true, pad)

    col_losses = pl.pallas_call(
        _listnet_loss_kernel,
        out_shape=jax.ShapeDtypeStruct((1, m_pad), jnp.float32),
        grid_spec=pltpu.PrefetchScalarGridSpec(
            num_scalar_prefetch=0,
            grid=(num_tiles,),
            in_specs=[
                pl.BlockSpec((n, tile_m), lambda j: (0, j)),
                pl.BlockSpec((n, tile_m), lambda j: (0, j)),
            ],
            out_specs=pl.BlockSpec((1, tile_m), lambda j: (0, j)),
        ),
        compiler_params=pltpu.CompilerParams(
            dimension_semantics=("parallel",),
        ),
    )(y_pred, y_true)

    if m_pad != m:
        col_losses = col_losses[:, :m]   # MUST exclude padded columns

    # torch.mean of a 0-d tensor is a no-op: the loss is just the total sum.
    return jnp.sum(col_losses)


def _reference(y_pred, y_true):
    # Literal PyTorch formula (including the +1e-9 epsilon).
    pred_max = jax.nn.softmax(y_pred.astype(jnp.float32), axis=0) + 1e-9
    true_max = jax.nn.softmax(-y_true.astype(jnp.float32), axis=0)
    return -jnp.sum(true_max * jnp.log(pred_max))


if __name__ == "__main__":
    key = jax.random.PRNGKey(0)
    k1, k2, k3, k4 = jax.random.split(key, 4)

    # (N, M): N = list length (softmax dim, sublanes), M = number of lists (lanes).
    N, M = 8, 256
    y_pred = jax.random.normal(k1, (N, M), dtype=jnp.float32)
    y_true = jax.random.normal(k2, (N, M), dtype=jnp.float32)

    # 1) default tiling (2 tiles of 128 at this size -> pipelined, megacore-friendly)
    loss = listnet_loss(y_pred, y_true)
    jax.block_until_ready(loss)
    ref = _reference(y_pred, y_true)
    assert jnp.allclose(loss, ref, rtol=1e-4, atol=1e-4), (loss, ref)

    # 2) unaligned M path: pad to a multiple of tile_m, slice before the sum.
    Mu = 200
    y_pred_u = jax.random.normal(k3, (N, Mu), dtype=jnp.float32)
    y_true_u = jax.random.normal(k4, (N, Mu), dtype=jnp.float32)
    loss_u = listnet_loss(y_pred_u, y_true_u)
    jax.block_until_ready(loss_u)
    ref_u = _reference(y_pred_u, y_true_u)
    assert jnp.allclose(loss_u, ref_u, rtol=1e-4, atol=1e-4), (loss_u, ref_u)

    # 3) larger shape exercising the >=4-step grid (N=16, M=1024 -> 4 tiles).
    N2, M2 = 16, 1024
    y_pred_l = jax.random.normal(k1, (N2, M2), dtype=jnp.float32)
    y_true_l = jax.random.normal(k2, (N2, M2), dtype=jnp.float32)
    loss_l = listnet_loss(y_pred_l, y_true_l)
    jax.block_until_ready(loss_l)
    ref_l = _reference(y_pred_l, y_true_l)
    assert jnp.allclose(loss_l, ref_l, rtol=1e-4, atol=1e-4), (loss_l, ref_l)

    print("KERNEL_OK")
</pallas_src>

<mosaic_0001>
module attributes {stable_mosaic.version = 11 : i64} {
  func.func @_listnet_loss_kernel(%arg0: i32, %arg1: memref<8x128xf32, #tpu.memory_space<vmem>>, %arg2: memref<8x128xf32, #tpu.memory_space<vmem>>, %arg3: memref<1x128xf32, #tpu.memory_space<vmem>>) attributes {dimension_semantics = [#tpu.dimension_semantics<parallel>], iteration_bounds = array<i64: 2>, scalar_prefetch = 0 : i64, scratch_operands = 0 : i64, tpu.core_type = #tpu.core_type<tc>, window_params = [{transform_indices = @transform_0, window_bounds = array<i64: 8, 128>}, {transform_indices = @transform_1, window_bounds = array<i64: 8, 128>}, {transform_indices = @transform_2, window_bounds = array<i64: 1, 128>}]} {
    %c0 = arith.constant 0 : index
    %c0_0 = arith.constant 0 : index
    %0 = vector.load %arg1[%c0, %c0_0] : memref<8x128xf32, #tpu.memory_space<vmem>>, vector<8x128xf32>
    %c0_1 = arith.constant 0 : index
    %c0_2 = arith.constant 0 : index
    %1 = vector.load %arg2[%c0_1, %c0_2] : memref<8x128xf32, #tpu.memory_space<vmem>>, vector<8x128xf32>
    %cst = arith.constant dense<0xFF800000> : vector<128xf32>
    %2 = vector.multi_reduction <maximumf>, %0, %cst [0] : vector<8x128xf32> to vector<128xf32>
    %3 = vector.shape_cast %2 : vector<128xf32> to vector<1x128xf32>
    %4 = vector.broadcast %3 : vector<1x128xf32> to vector<8x128xf32>
    %5 = arith.subf %0, %4 : vector<8x128xf32>
    %6 = math.exp %5 : vector<8x128xf32>
    %cst_3 = arith.constant dense<0.000000e+00> : vector<128xf32>
    %7 = vector.multi_reduction <add>, %6, %cst_3 [0] : vector<8x128xf32> to vector<128xf32>
    %8 = vector.shape_cast %7 : vector<128xf32> to vector<1x128xf32>
    %cst_4 = arith.constant dense<0x7F800000> : vector<128xf32>
    %9 = vector.multi_reduction <minimumf>, %1, %cst_4 [0] : vector<8x128xf32> to vector<128xf32>
    %10 = vector.shape_cast %9 : vector<128xf32> to vector<1x128xf32>
    %11 = vector.broadcast %10 : vector<1x128xf32> to vector<8x128xf32>
    %12 = arith.subf %11, %1 : vector<8x128xf32>
    %13 = math.exp %12 : vector<8x128xf32>
    %cst_5 = arith.constant dense<0.000000e+00> : vector<128xf32>
    %14 = vector.multi_reduction <add>, %13, %cst_5 [0] : vector<8x128xf32> to vector<128xf32>
    %15 = vector.shape_cast %14 : vector<128xf32> to vector<1x128xf32>
    %16 = arith.mulf %13, %5 : vector<8x128xf32>
    %cst_6 = arith.constant dense<0.000000e+00> : vector<128xf32>
    %17 = vector.multi_reduction <add>, %16, %cst_6 [0] : vector<8x128xf32> to vector<128xf32>
    %18 = vector.shape_cast %17 : vector<128xf32> to vector<1x128xf32>
    %19 = math.log %8 : vector<1x128xf32>
    %20 = arith.divf %18, %15 : vector<1x128xf32>
    %21 = arith.subf %19, %20 : vector<1x128xf32>
    %c0_7 = arith.constant 0 : index
    %c0_8 = arith.constant 0 : index
    %22 = vector.load %arg3[%c0_7, %c0_8] : memref<1x128xf32, #tpu.memory_space<vmem>>, vector<1x128xf32>
    tpu.vector_store %arg3[%c0_7, %c0_8], %21 {strides = array<i32>} : memref<1x128xf32, #tpu.memory_space<vmem>>, vector<1x128xf32>,
    return
  }
  func.func @transform_0(%arg0: i32) -> (i32, i32) {
    %c0_i32 = arith.constant 0 : i32
    %c0_i32_0 = arith.constant 0 : i32
    return %c0_i32, %arg0 : i32, i32
  }
  func.func @transform_1(%arg0: i32) -> (i32, i32) {
    %c0_i32 = arith.constant 0 : i32
    %c0_i32_0 = arith.constant 0 : i32
    return %c0_i32, %arg0 : i32, i32
  }
  func.func @transform_2(%arg0: i32) -> (i32, i32) {
    %c0_i32 = arith.constant 0 : i32
    %c0_i32_0 = arith.constant 0 : i32
    return %c0_i32, %arg0 : i32, i32
  }
}

</mosaic_0001>

<llo_original>
// kernel: tpu_custom_call.1
$region0: #{tpu_custom_call.1}
  #allocation0 [shape = 'u32[]', space=smem, size = 0x4, offset = 0x4, fixed_abs, tag = 'smem constant byte address 0x4 - core index']
  #allocation1 [shape = 'u32[144,128]{1,0:T(1,128)}', space=vmem, size = 0x12000, scoped, tag = 'internal scratch']
  %s0 = inlined_call_operand.hbm [shape: f32[8,256], index: 0, kind: input, shape index: {}]
  %s1 = inlined_call_operand.hbm [shape: f32[8,256], index: 1, kind: input, shape index: {}]
  %s2 = inlined_call_operand.hbm [shape: f32[1,256], index: 2, kind: output, shape index: {}]
  %s3 = sld [smem:[#allocation0]]
  $region49: #{tpu_custom_call.1} parent=0
    _
  %s5 = ssub.s32 1, %s3
  %s6 = scalar_select 0, %s5, %s3
  $region1: #{tpu_custom_call.1} parent=0
    #allocation2 [shape = 'u8[8192]{0}', space=vmem, size = 0x2000, scoped, tag = 'input window, operand 0']
    #allocation3 [shape = 's32[2]{0}', space=sflag, size = 0x8, scoped, tag = 'scoped memory for tpu_custom_call.1']
    #allocation4 [shape = 's32[2]{0}', space=sflag, size = 0x8, scoped, tag = 'scoped memory for tpu_custom_call.1']
    #allocation5 [shape = 'u8[8192]{0}', space=vmem, size = 0x2000, scoped, tag = 'input window, operand 1']
    #allocation6 [shape = 's32[2]{0}', space=sflag, size = 0x8, scoped, tag = 'scoped memory for tpu_custom_call.1']
    #allocation7 [shape = 'u8[1024]{0}', space=vmem, size = 0x400, scoped, tag = 'output window, operand 0']
    %7 = vsyncpa [#allocation3], 0
    %s8 = scalar_lea.sflag [#allocation3], 1
    %9 = vsyncpa %s8, 0
    %10 = vsyncpa [#allocation6], 0
    %s11 = scalar_lea.sflag [#allocation6], 1
    %12 = vsyncpa %s11, 0
    %13 = vsyncpa [#allocation4], 0
    %s14 = scalar_lea.sflag [#allocation4], 1
    %15 = vsyncpa %s14, 0
    loop: start=0, step=1, limit=4
    $region2: #{tpu_custom_call.1} parent=1 // loop_pre_header
      _
    $region3: #{tpu_custom_call.1} parent=1 // loop_header
      %s17 = sphi 0, %s21
      %p18 = scmp.ge.s32.totalorder %s17, 4
      %s27 = sphi 0, %s29
      %s30 = sphi 0, %s27
      %s31 = sphi 0, %s30
      %s47 = sphi 0, %s31
      %s53 = sphi 0, %s55
      %s56 = sphi 0, %s53
      %s57 = sphi 0, %s56
      %s73 = sphi 0, %s57
      %s79 = sphi 0, %s81
      %s82 = sphi 0, %s79
      %s83 = sphi 0, %s82
      %s99 = sphi 0, %s83
    $region4: #{tpu_custom_call.1} parent=1 // loop_header_branch
      %20 = sbr.rel (%p18) target = $region8
    $region5: #{tpu_custom_call.1} parent=1 // loop_body
      %s22 = ssub.s32 %s17, 1
      %s23 = ssub.s32 %s17, 2
      %s24 = sadd.s32 %s17, 1
      %s25 = ssub.s32 %s17, %s24
      %p26 = scmp.eq.s32.totalorder %s25, 0
      %s28 = sadd.s32 %s27, 1
      %s29 = scalar_select %p26, %s27, %s28
      %p32 = pneg %p26
      %p33 = scmp.eq.s32.totalorder %s17, 1
      %p34 = por %p32, %p33
      %p35 = scmp.ne.s32.totalorder %s27, %s30
      %p36 = scmp.eq.s32.totalorder %s17, 0
      %p37 = por %p35, %p36
      %p38 = scmp.ne.s32.totalorder %s27, %s30
      %p39 = scmp.eq.s32.totalorder %s22, 1
      %p40 = por %p38, %p39
      %p41 = scmp.ne.s32.totalorder %s30, %s31
      %p42 = scmp.eq.s32.totalorder %s22, 0
      %p43 = por %p41, %p42
      %p44 = scmp.ne.s32.totalorder %s30, %s31
      %p45 = scmp.eq.s32.totalorder %s23, 1
      %p46 = por %p44, %p45
      %p48 = scmp.ne.s32.totalorder %s31, %s47
      %p49 = scmp.eq.s32.totalorder %s23, 0
      %p50 = por %p48, %p49
      %s51 = ssub.s32 %s17, %s24
      %p52 = scmp.eq.s32.totalorder %s51, 0
      %s54 = sadd.s32 %s53, 1
      %s55 = scalar_select %p52, %s53, %s54
      %p58 = pneg %p52
      %p59 = scmp.eq.s32.totalorder %s17, 1
      %p60 = por %p58, %p59
      %p61 = scmp.ne.s32.totalorder %s53, %s56
      %p62 = scmp.eq.s32.totalorder %s17, 0
      %p63 = por %p61, %p62
      %p64 = scmp.ne.s32.totalorder %s53, %s56
      %p65 = scmp.eq.s32.totalorder %s22, 1
      %p66 = por %p64, %p65
      %p67 = scmp.ne.s32.totalorder %s56, %s57
      %p68 = scmp.eq.s32.totalorder %s22, 0
      %p69 = por %p67, %p68
      %p70 = scmp.ne.s32.totalorder %s56, %s57
      %p71 = scmp.eq.s32.totalorder %s23, 1
      %p72 = por %p70, %p71
      %p74 = scmp.ne.s32.totalorder %s57, %s73
      %p75 = scmp.eq.s32.totalorder %s23, 0
      %p76 = por %p74, %p75
      %s77 = ssub.s32 %s17, %s24
      %p78 = scmp.eq.s32.totalorder %s77, 0
      %s80 = sadd.s32 %s79, 1
      %s81 = scalar_select %p78, %s79, %s80
      %p84 = pneg %p78
      %p85 = scmp.eq.s32.totalorder %s17, 1
      %p86 = por %p84, %p85
      %p87 = scmp.ne.s32.totalorder %s79, %s82
      %p88 = scmp.eq.s32.totalorder %s17, 0
      %p89 = por %p87, %p88
      %p90 = scmp.ne.s32.totalorder %s79, %s82
      %p91 = scmp.eq.s32.totalorder %s22, 1
      %p92 = por %p90, %p91
      %p93 = scmp.ne.s32.totalorder %s82, %s83
      %p94 = scmp.eq.s32.totalorder %s22, 0
      %p95 = por %p93, %p94
      %p96 = scmp.ne.s32.totalorder %s82, %s83
      %p97 = scmp.eq.s32.totalorder %s23, 1
      %p98 = por %p96, %p97
      %p100 = scmp.ne.s32.totalorder %s83, %s99
      %p101 = scmp.eq.s32.totalorder %s23, 0
      %p102 = por %p100, %p101
      %p103 = scmp.le.s32.totalorder 1, %s17
      %p104 = scmp.lt.s32.totalorder %s17, 3
      %p105 = pnand %p103, %p104
      %p106 = pneg %p105
      // Predicated region
      $region9: #{tpu_custom_call.1} parent=5 // pred_check
        _
      $region10: #{tpu_custom_call.1} parent=5 // pred_check_branch
        %108 = sbr.rel (%p105) target = $region12
      $region11: #{tpu_custom_call.1} parent=5 // pred_region
        %s109 = ssub.s32 %s17, 1
      $region12: #{tpu_custom_call.1} parent=5 // pred_fallthru
        _
      %p110 = scmp.lt.s32.totalorder %s17, 2
      // Predicated region
      $region13: #{tpu_custom_call.1} parent=5 // pred_check
        %p111 = pneg %p110
      $region14: #{tpu_custom_call.1} parent=5 // pred_check_branch
        %113 = sbr.rel (%p111) target = $region16
      $region15: #{tpu_custom_call.1} parent=5 // pred_region
        // Predicated region
        $region17: #{tpu_custom_call.1} parent=15 // pred_check
          %p114 = pneg %p37
        $region18: #{tpu_custom_call.1} parent=15 // pred_check_branch
          %116 = sbr.rel (%p114) target = $region20
        $region19: #{tpu_custom_call.1} parent=15 // pred_region
          %s117 = sand.u32 %s27, 1
          %s118 = scalar_lea.sflag [#allocation3], %s117
          %s119 = sand.u32 %s27, 1
          %s120 = smul.addr %s119, 8
          %s121 = scalar_lea.vmem [#allocation2], %s120
          %s123 = ssub.s32 128, 128
          %124 = vsyncadd %s118, %s123
          %s125 = smul.addr %s17, 128
          %s126 = scalar_lea.hbm %s0, %s125
          %s128 = sshll.u32 %s121, 4
          %s129 = int_to_ptr.vmem [resolvable:$true] %s128
          %131 = dma.hbm_to_vmem [thread:$0]  %s126, 128, %s129, %s118
        $region20: #{tpu_custom_call.1} parent=15 // pred_fallthru
          _
        // Predicated region
        $region21: #{tpu_custom_call.1} parent=15 // pred_check
          %p132 = pneg %p63
        $region22: #{tpu_custom_call.1} parent=15 // pred_check_branch
          %134 = sbr.rel (%p132) target = $region24
        $region23: #{tpu_custom_call.1} parent=15 // pred_region
          %s135 = sand.u32 %s53, 1
          %s136 = scalar_lea.sflag [#allocation6], %s135
          %s137 = sand.u32 %s53, 1
          %s138 = smul.addr %s137, 8
          %s139 = scalar_lea.vmem [#allocation5], %s138
          %s141 = ssub.s32 128, 128
          %142 = vsyncadd %s136, %s141
          %s143 = smul.addr %s17, 128
          %s144 = scalar_lea.hbm %s1, %s143
          %s146 = sshll.u32 %s139, 4
          %s147 = int_to_ptr.vmem [resolvable:$true] %s146
          %149 = dma.hbm_to_vmem [thread:$0]  %s144, 128, %s147, %s136
        $region24: #{tpu_custom_call.1} parent=15 // pred_fallthru
          _
      $region16: #{tpu_custom_call.1} parent=5 // pred_fallthru
        _
      %p150 = scmp.le.s32.totalorder 1, %s17
      %p151 = scmp.lt.s32.totalorder %s17, 3
      %p152 = pnand %p150, %p151
      %p153 = pneg %p152
      // Predicated region
      $region25: #{tpu_custom_call.1} parent=5 // pred_check
        _
      $region26: #{tpu_custom_call.1} parent=5 // pred_check_branch
        %155 = sbr.rel (%p152) target = $region28
      $region27: #{tpu_custom_call.1} parent=5 // pred_region
        %s156 = ssub.s32 %s17, 1
        %s157 = sand.u32 %s30, 1
        %s158 = scalar_lea.sflag [#allocation3], %s157
        %s159 = sand.u32 %s30, 1
        %s160 = smul.addr %s159, 8
        %s161 = scalar_lea.vmem [#allocation2], %s160
        // Predicated region
        $region29: #{tpu_custom_call.1} parent=27 // pred_check
          %p162 = pneg %p43
        $region30: #{tpu_custom_call.1} parent=27 // pred_check_branch
          %164 = sbr.rel (%p162) target = $region32
        $region31: #{tpu_custom_call.1} parent=27 // pred_region
          %165 = dma.done %s158, 128
        $region32: #{tpu_custom_call.1} parent=27 // pred_fallthru
          _
        %s166 = sand.u32 %s56, 1
        %s167 = scalar_lea.sflag [#allocation6], %s166
        %s168 = sand.u32 %s56, 1
        %s169 = smul.addr %s168, 8
        %s170 = scalar_lea.vmem [#allocation5], %s169
        // Predicated region
        $region33: #{tpu_custom_call.1} parent=27 // pred_check
          %p171 = pneg %p69
        $region34: #{tpu_custom_call.1} parent=27 // pred_check_branch
          %173 = sbr.rel (%p171) target = $region36
        $region35: #{tpu_custom_call.1} parent=27 // pred_region
          %174 = dma.done %s167, 128
        $region36: #{tpu_custom_call.1} parent=27 // pred_fallthru
          _
        %s175 = sand.u32 %s30, 1
        %s176 = scalar_lea.sflag [#allocation3], %s175
        %s177 = sand.u32 %s30, 1
        %s178 = smul.addr %s177, 8
        %s179 = scalar_lea.vmem [#allocation2], %s178
        %p180 = pneg %p43
        %p181 = pneg %p40
        %s182 = sand.u32 %s56, 1
        %s183 = scalar_lea.sflag [#allocation6], %s182
        %s184 = sand.u32 %s56, 1
        %s185 = smul.addr %s184, 8
        %s186 = scalar_lea.vmem [#allocation5], %s185
        %p187 = pneg %p69
        %p188 = pneg %p66
        %p189 = pneg %p95
        %p190 = pneg %p92
        %s191 = sand.u32 %s82, 1
        %s192 = scalar_lea.sflag [#allocation4], %s191
        %s193 = sand.u32 %s82, 1
        %s194 = scalar_lea.vmem [#allocation7], %s193
        %v195 = vld [vmem:[%s161] sm:$0xff]
        %v196 = vld [vmem:[%s170] sm:$0xff]
        %v197 = vrot.slane %v195, 4
        %v198 = vmax.f32 %v195, %v197
        %v199 = vrot.slane %v198, 2
        %v200 = vmax.f32 %v198, %v199
        %v201 = vrot.slane %v200, 1
        %v202 = vmax.f32 %v200, %v201
        %v203 = vsub.f32 %v195, %v202
        %v204 = vmul.f32 %v203, 1.442695
        %v205 = vpow.pop %v204
        %v206 = vrot.slane %v205, 4
        %v207 = vadd.f32 %v205, %v206
        %v208 = vrot.slane %v207, 2
        %v209 = vadd.f32 %v207, %v208
        %v210 = vrot.slane %v209, 1
        %v211 = vadd.f32 %v209, %v210
        %v212 = vrot.slane %v196, 4
        %v213 = vmin.f32 %v196, %v212
        %v214 = vrot.slane %v213, 2
        %v215 = vmin.f32 %v213, %v214
        %v216 = vrot.slane %v215, 1
        %v217 = vmin.f32 %v215, %v216
        %v218 = vsub.f32 %v217, %v196
        %v219 = vmul.f32 %v218, 1.442695
        %v220 = vpow.pop %v219
        %v221 = vrot.slane %v220, 4
        %v222 = vadd.f32 %v220, %v221
        %v223 = vrot.slane %v222, 2
        %v224 = vadd.f32 %v222, %v223
        %v225 = vrot.slane %v224, 1
        %v226 = vadd.f32 %v224, %v225
        %v227 = vmul.f32 %v220, %v203
        %v228 = vrot.slane %v227, 4
        %v229 = vadd.f32 %v227, %v228
        %v230 = vrot.slane %v229, 2
        %v231 = vadd.f32 %v229, %v230
        %v232 = vrot.slane %v231, 1
        %v233 = vadd.f32 %v231, %v232
        %v234 = vlog2.pop %v211
        %v235 = vmul.f32 %v234, 0.6931472
        %v236 = vrcp.pop %v226
        %v237 = vmul.f32 %v233, %v236
        %v238 = vsub.f32 %v235, %v237
        %239 = vst [vmem:[%s194] sm:$0x1] %v238
        %s240 = sand.u32 %s82, 1
        %s241 = scalar_lea.sflag [#allocation4], %s240
        %s242 = sand.u32 %s82, 1
        %s243 = scalar_lea.vmem [#allocation7], %s242
        // Predicated region
        $region37: #{tpu_custom_call.1} parent=27 // pred_check
          %p244 = pneg %p92
        $region38: #{tpu_custom_call.1} parent=27 // pred_check_branch
          %246 = sbr.rel (%p244) target = $region40
        $region39: #{tpu_custom_call.1} parent=27 // pred_region
          %s248 = ssub.s32 16, 16
          %249 = vsyncadd %s241, %s248
          %s250 = smul.addr %s22, 16
          %s251 = scalar_lea.hbm %s2, %s250
          %s253 = sshll.u32 %s243, 4
          %s254 = int_to_ptr.vmem [resolvable:$true] %s253
          %256 = dma.vmem_to_hbm [thread:$0]  %s254, 16, %s251, %s241
        $region40: #{tpu_custom_call.1} parent=27 // pred_fallthru
          _
      $region28: #{tpu_custom_call.1} parent=5 // pred_fallthru
        _
      %p257 = scmp.le.s32.totalorder 2, %s17
      // Predicated region
      $region41: #{tpu_custom_call.1} parent=5 // pred_check
        %p258 = pneg %p257
      $region42: #{tpu_custom_call.1} parent=5 // pred_check_branch
        %260 = sbr.rel (%p258) target = $region44
      $region43: #{tpu_custom_call.1} parent=5 // pred_region
        %s261 = ssub.s32 %s17, 2
        // Predicated region
        $region45: #{tpu_custom_call.1} parent=43 // pred_check
          %p262 = pneg %p98
        $region46: #{tpu_custom_call.1} parent=43 // pred_check_branch
          %264 = sbr.rel (%p262) target = $region48
        $region47: #{tpu_custom_call.1} parent=43 // pred_region
          %s265 = sand.u32 %s83, 1
          %s266 = scalar_lea.sflag [#allocation4], %s265
          %s267 = sand.u32 %s83, 1
          %s268 = scalar_lea.vmem [#allocation7], %s267
          %269 = dma.done %s266, 16
        $region48: #{tpu_custom_call.1} parent=43 // pred_fallthru
          _
      $region44: #{tpu_custom_call.1} parent=5 // pred_fallthru
        _
    $region6: #{tpu_custom_call.1} parent=1 // loop_footer
      %s21 = sadd.s32 1, %s17
    $region7: #{tpu_custom_call.1} parent=1 // loop_footer_branch
      %16 = sbr.rel target = $region3
    $region8: #{tpu_custom_call.1} parent=1 // loop_exit
      _
    %270 = vsyncpa [#allocation3], 1
    %s271 = scalar_lea.sflag [#allocation3], 1
    %272 = vsyncpa %s271, 1
    %273 = vsyncpa [#allocation6], 1
    %s274 = scalar_lea.sflag [#allocation6], 1
    %275 = vsyncpa %s274, 1
    %276 = vsyncpa [#allocation4], 1
    %s277 = scalar_lea.sflag [#allocation4], 1
    %278 = vsyncpa %s277, 1

</llo_original>
